<compile_context>
chip_gen: v5e
topology: v5e:2x2
jax: 0.10.0
libtpu: 0.0.40
codegen_flags: <defaults>
</compile_context>

<pallas_src>
import jax
import jax.numpy as jnp
from jax.experimental import pallas as pl
from jax.experimental.pallas import tpu as pltpu

_LANE = 128


def likelihood_conditioner_kernel(ctx_ref, w1_ref, b1_ref, w2_ref, b2_ref, out_ref):
    """Fused 2-layer MLP conditioner producing (padded) Bernoulli logits.

    ctx_ref : (Bb, Dctx)  bf16  concat([z, history]) block
    w1_ref  : (Dctx, H)   bf16
    b1_ref  : (1, H)      f32
    w2_ref  : (H, Ep)     bf16  (event dim zero-padded to a multiple of 128)
    b2_ref  : (1, Ep)     f32
    out_ref : (Bb, Ep)    f32   logits of P(x_i | z, x_{<i}) (padded lanes)
    """
    # First-layer MXU dot with K = Dz + De, f32 accumulation; bias + ReLU on VPU.
    pre = jnp.dot(ctx_ref[...], w1_ref[...],
                  preferred_element_type=jnp.float32) + b1_ref[...]
    hid = jnp.maximum(pre, 0.0)
    # Second-layer MXU dot; re-quantize the hidden activation to bf16 for the MXU.
    logits = jnp.dot(hid.astype(w2_ref.dtype), w2_ref[...],
                     preferred_element_type=jnp.float32) + b2_ref[...]
    out_ref[...] = logits.astype(out_ref.dtype)


def likelihood_layer_forward(inputs, history, params, *, block_b=None):
    """Pallas-backed forward: returns Bernoulli logits of shape (B, event_size)."""
    w1, b1, w2, b2 = params["w1"], params["b1"], params["w2"], params["b2"]
    B, Dz = inputs.shape
    De = history.shape[1]
    Dctx = Dz + De
    H = w1.shape[1]
    E = w2.shape[1]

    # Lane-dense output: pad the event dim to a multiple of 128 (zero columns).
    E_pad = ((E + _LANE - 1) // _LANE) * _LANE

    # Concat fused outside the kernel (cheap, fully hidden XLA copy);
    # matmul operands in bf16, biases / accumulation in f32.
    ctx = jnp.concatenate([inputs, history], axis=-1).astype(jnp.bfloat16)
    w1_bf = w1.astype(jnp.bfloat16)
    w2_bf = jnp.pad(w2, ((0, 0), (0, E_pad - E))).astype(jnp.bfloat16)
    b1_f = b1.astype(jnp.float32)
    b2_f = jnp.pad(b2, ((0, 0), (0, E_pad - E))).astype(jnp.float32)

    # Batch tiling: cap the block so big batches get a pipelined, megacore-
    # shardable grid; small batches run in one step with full-extent blocks.
    if block_b is None:
        block_b = B if B <= 512 else 512
    grid = (pl.cdiv(B, block_b),)

    # VMEM estimate: double-buffered ctx/out blocks + weights/biases (x2 bufs).
    vmem_needed = (2 * block_b * Dctx * 2          # ctx blocks (bf16)
                   + 2 * block_b * E_pad * 4       # out blocks (f32)
                   + 2 * (Dctx * H + H * E_pad) * 2  # W1, W2 (bf16)
                   + 2 * (H + E_pad) * 4)          # b1, b2 (f32)
    # Clamp: generous headroom but safely below the 64 MiB v7x physical VMEM.
    vmem_limit = min(48 * 1024 * 1024,
                     max(16 * 1024 * 1024, int(vmem_needed * 3 // 2)))

    out_padded = pl.pallas_call(
        likelihood_conditioner_kernel,
        out_shape=jax.ShapeDtypeStruct((B, E_pad), jnp.float32),
        grid_spec=pl.GridSpec(
            grid=grid,
            in_specs=[
                pl.BlockSpec((block_b, Dctx), lambda i: (i, 0)),   # ctx block
                pl.BlockSpec((Dctx, H), lambda i: (0, 0)),         # W1 (constant)
                pl.BlockSpec((1, H), lambda i: (0, 0)),            # b1 (constant)
                pl.BlockSpec((H, E_pad), lambda i: (0, 0)),        # W2 (padded)
                pl.BlockSpec((1, E_pad), lambda i: (0, 0)),        # b2 (padded)
            ],
            out_specs=pl.BlockSpec((block_b, E_pad), lambda i: (i, 0)),
        ),
        compiler_params=pltpu.CompilerParams(
            dimension_semantics=("parallel",),
            vmem_limit_bytes=vmem_limit),
    )(ctx, w1_bf, b1_f, w2_bf, b2_f)

    return out_padded[:, :E]


def init_params(key, z_dim, event_size, hidden):
    """Deterministic synthetic parameters for the FF conditioner (f32 master)."""
    k1, k2 = jax.random.split(key, 2)
    ctx_dim = z_dim + event_size
    w1 = jax.random.normal(k1, (ctx_dim, hidden), jnp.float32) * (1.0 / jnp.sqrt(ctx_dim))
    w2 = jax.random.normal(k2, (hidden, event_size), jnp.float32) * (1.0 / jnp.sqrt(hidden))
    b1 = jnp.zeros((1, hidden), jnp.float32)
    b2 = jnp.zeros((1, event_size), jnp.float32)
    return {"w1": w1, "b1": b1, "w2": w2, "b2": b2}


def reference_forward(inputs, history, params):
    """Pure-JAX reference mirroring the kernel's bf16-in / f32-accumulate math."""
    ctx = jnp.concatenate([inputs, history], axis=-1).astype(jnp.bfloat16)
    w1 = params["w1"].astype(jnp.bfloat16)
    w2 = params["w2"].astype(jnp.bfloat16)
    pre = jnp.dot(ctx, w1, preferred_element_type=jnp.float32) + params["b1"]
    hid = jnp.maximum(pre, 0.0)
    return jnp.dot(hid.astype(jnp.bfloat16), w2,
                   preferred_element_type=jnp.float32) + params["b2"]


# TODO(synk): constructing the torch.distributions.Distribution object and
# sample() have no array-level Pallas equivalent; the kernel returns the
# distribution parameters (Bernoulli logits).

if __name__ == "__main__":
    key = jax.random.PRNGKey(0)
    kz, kh, kp = jax.random.split(key, 3)

    batch = 8
    z_dim = 32          # dimensionality of `inputs` (latent z)
    event_size = 16     # dimensionality of the random variable x_i
    hidden = 32         # conditioner hidden size

    inputs = jax.random.normal(kz, (batch, z_dim), jnp.float32)
    history = jax.random.normal(kh, (batch, event_size), jnp.float32)
    params = init_params(kp, z_dim, event_size, hidden)

    logits = likelihood_layer_forward(inputs, history, params)
    logits = jax.block_until_ready(logits)

    ref = reference_forward(inputs, history, params)
    assert logits.shape == (batch, event_size)
    assert jnp.allclose(logits, ref, atol=1e-2, rtol=1e-2)

    print("KERNEL_OK")
</pallas_src>

<mosaic_0001>
module attributes {stable_mosaic.version = 11 : i64} {
  func.func @likelihood_conditioner_kernel(%arg0: i32, %arg1: memref<8x48xbf16, #tpu.memory_space<vmem>>, %arg2: memref<48x32xbf16, #tpu.memory_space<vmem>>, %arg3: memref<1x32xf32, #tpu.memory_space<vmem>>, %arg4: memref<32x128xbf16, #tpu.memory_space<vmem>>, %arg5: memref<1x128xf32, #tpu.memory_space<vmem>>, %arg6: memref<8x128xf32, #tpu.memory_space<vmem>>) attributes {dimension_semantics = [#tpu.dimension_semantics<parallel>], iteration_bounds = array<i64: 1>, scalar_prefetch = 0 : i64, scratch_operands = 0 : i64, tpu.core_type = #tpu.core_type<tc>, window_params = [{transform_indices = @transform_0, window_bounds = array<i64: 8, 48>}, {pipeline_mode = #tpu.pipeline_mode<synchronous>, transform_indices = @transform_1, window_bounds = array<i64: 48, 32>}, {pipeline_mode = #tpu.pipeline_mode<synchronous>, transform_indices = @transform_2, window_bounds = array<i64: 1, 32>}, {pipeline_mode = #tpu.pipeline_mode<synchronous>, transform_indices = @transform_3, window_bounds = array<i64: 32, 128>}, {pipeline_mode = #tpu.pipeline_mode<synchronous>, transform_indices = @transform_4, window_bounds = array<i64: 1, 128>}, {transform_indices = @transform_5, window_bounds = array<i64: 8, 128>}]} {
    %c0 = arith.constant 0 : index
    %c0_0 = arith.constant 0 : index
    %0 = vector.load %arg1[%c0, %c0_0] : memref<8x48xbf16, #tpu.memory_space<vmem>>, vector<8x48xbf16>
    %c0_1 = arith.constant 0 : index
    %c0_2 = arith.constant 0 : index
    %1 = vector.load %arg2[%c0_1, %c0_2] : memref<48x32xbf16, #tpu.memory_space<vmem>>, vector<48x32xbf16>
    %cst = arith.constant dense<0.000000e+00> : vector<8x32xf32>
    %2 = tpu.matmul %0, %1, %cst {dimension_numbers = #tpu.dot_dimension_numbers<[1], [0], [0], [1], [0, 0, 1, 1], [], []>} : vector<8x48xbf16>, vector<48x32xbf16>, vector<8x32xf32> -> vector<8x32xf32>
    %c0_3 = arith.constant 0 : index
    %c0_4 = arith.constant 0 : index
    %3 = vector.load %arg3[%c0_3, %c0_4] : memref<1x32xf32, #tpu.memory_space<vmem>>, vector<1x32xf32>
    %4 = vector.broadcast %3 : vector<1x32xf32> to vector<8x32xf32>
    %5 = arith.addf %2, %4 : vector<8x32xf32>
    %cst_5 = arith.constant 0.000000e+00 : f32
    %6 = vector.broadcast %cst_5 : f32 to vector<8x32xf32>
    %7 = arith.maximumf %5, %6 : vector<8x32xf32>
    %8 = arith.truncf %7 : vector<8x32xf32> to vector<8x32xbf16>
    %c0_6 = arith.constant 0 : index
    %c0_7 = arith.constant 0 : index
    %9 = vector.load %arg4[%c0_6, %c0_7] : memref<32x128xbf16, #tpu.memory_space<vmem>>, vector<32x128xbf16>
    %cst_8 = arith.constant dense<0.000000e+00> : vector<8x128xf32>
    %10 = tpu.matmul %8, %9, %cst_8 {dimension_numbers = #tpu.dot_dimension_numbers<[1], [0], [0], [1], [0, 0, 1, 1], [], []>} : vector<8x32xbf16>, vector<32x128xbf16>, vector<8x128xf32> -> vector<8x128xf32>
    %c0_9 = arith.constant 0 : index
    %c0_10 = arith.constant 0 : index
    %11 = vector.load %arg5[%c0_9, %c0_10] : memref<1x128xf32, #tpu.memory_space<vmem>>, vector<1x128xf32>
    %12 = vector.broadcast %11 : vector<1x128xf32> to vector<8x128xf32>
    %13 = arith.addf %10, %12 : vector<8x128xf32>
    %c0_11 = arith.constant 0 : index
    %c0_12 = arith.constant 0 : index
    %14 = vector.load %arg6[%c0_11, %c0_12] : memref<8x128xf32, #tpu.memory_space<vmem>>, vector<8x128xf32>
    tpu.vector_store %arg6[%c0_11, %c0_12], %13 {strides = array<i32>} : memref<8x128xf32, #tpu.memory_space<vmem>>, vector<8x128xf32>,
    return
  }
  func.func @transform_0(%arg0: i32) -> (i32, i32) {
    %c0_i32 = arith.constant 0 : i32
    %c0_i32_0 = arith.constant 0 : i32
    return %arg0, %c0_i32 : i32, i32
  }
  func.func @transform_1(%arg0: i32) -> (i32, i32) {
    %c0_i32 = arith.constant 0 : i32
    %c0_i32_0 = arith.constant 0 : i32
    %c0_i32_1 = arith.constant 0 : i32
    return %c0_i32, %c0_i32_0 : i32, i32
  }
  func.func @transform_2(%arg0: i32) -> (i32, i32) {
    %c0_i32 = arith.constant 0 : i32
    %c0_i32_0 = arith.constant 0 : i32
    %c0_i32_1 = arith.constant 0 : i32
    return %c0_i32, %c0_i32_0 : i32, i32
  }
  func.func @transform_3(%arg0: i32) -> (i32, i32) {
    %c0_i32 = arith.constant 0 : i32
    %c0_i32_0 = arith.constant 0 : i32
    %c0_i32_1 = arith.constant 0 : i32
    return %c0_i32, %c0_i32_0 : i32, i32
  }
  func.func @transform_4(%arg0: i32) -> (i32, i32) {
    %c0_i32 = arith.constant 0 : i32
    %c0_i32_0 = arith.constant 0 : i32
    %c0_i32_1 = arith.constant 0 : i32
    return %c0_i32, %c0_i32_0 : i32, i32
  }
  func.func @transform_5(%arg0: i32) -> (i32, i32) {
    %c0_i32 = arith.constant 0 : i32
    %c0_i32_0 = arith.constant 0 : i32
    return %arg0, %c0_i32 : i32, i32
  }
}

</mosaic_0001>

<llo_original>
// kernel: tpu_custom_call.1
$region0: #{tpu_custom_call.1}
  #allocation0 [shape = 'u32[]', space=smem, size = 0x4, offset = 0x4, fixed_abs, tag = 'smem constant byte address 0x4 - core index']
  #allocation1 [shape = 'u32[72,128]{1,0:T(1,128)}', space=vmem, size = 0x9000, scoped, tag = 'internal scratch']
  %s0 = inlined_call_operand.vmem [shape: bf16[8,48], index: 0, kind: input, shape index: {}]
  %s1 = inlined_call_operand.vmem [shape: bf16[48,32], index: 1, kind: input, shape index: {}]
  %s2 = inlined_call_operand.vmem [shape: f32[1,32], index: 2, kind: input, shape index: {}]
  %s3 = inlined_call_operand.vmem [shape: bf16[32,128], index: 3, kind: input, shape index: {}]
  %s4 = inlined_call_operand.vmem [shape: f32[1,128], index: 4, kind: input, shape index: {}]
  %s5 = inlined_call_operand.hbm [shape: f32[8,128], index: 5, kind: output, shape index: {}]
  %s6 = sld [smem:[#allocation0]]
  $region30: #{tpu_custom_call.1} parent=0
    _
  %s8 = ssub.s32 1, %s6
  %s9 = scalar_select 0, %s8, %s6
  $region1: #{tpu_custom_call.1} parent=0
    #allocation2 [shape = 'u8[4096]{0}', space=vmem, size = 0x1000, scoped, tag = 'output window, operand 0, single buffered']
    #allocation3 [shape = 's32[1]{0}', space=sflag, size = 0x4, scoped, tag = 'scoped memory for tpu_custom_call.1']
    %10 = vsyncpa [#allocation3], 0
    // Predicated region
    $region2: #{tpu_custom_call.1} parent=1 // pred_check
      _
    $region3: #{tpu_custom_call.1} parent=1 // pred_check_branch
      %12 = sbr.rel (0) target = $region5
    $region4: #{tpu_custom_call.1} parent=1 // pred_region
      _
    $region5: #{tpu_custom_call.1} parent=1 // pred_fallthru
      _
    // Predicated region
    $region6: #{tpu_custom_call.1} parent=1 // pred_check
      _
    $region7: #{tpu_custom_call.1} parent=1 // pred_check_branch
      %14 = sbr.rel (0) target = $region9
    $region8: #{tpu_custom_call.1} parent=1 // pred_region
      _
    $region9: #{tpu_custom_call.1} parent=1 // pred_fallthru
      _
    // Predicated region
    $region10: #{tpu_custom_call.1} parent=1 // pred_check
      _
    $region11: #{tpu_custom_call.1} parent=1 // pred_check_branch
      %16 = sbr.rel (0) target = $region13
    $region12: #{tpu_custom_call.1} parent=1 // pred_region
      _
    $region13: #{tpu_custom_call.1} parent=1 // pred_fallthru
      _
    // Predicated region
    $region14: #{tpu_custom_call.1} parent=1 // pred_check
      _
    $region15: #{tpu_custom_call.1} parent=1 // pred_check_branch
      %18 = sbr.rel (0) target = $region17
    $region16: #{tpu_custom_call.1} parent=1 // pred_region
      _
    $region17: #{tpu_custom_call.1} parent=1 // pred_fallthru
      _
    // Predicated region
    $region18: #{tpu_custom_call.1} parent=1 // pred_check
      _
    $region19: #{tpu_custom_call.1} parent=1 // pred_check_branch
      %20 = sbr.rel (0) target = $region21
    $region20: #{tpu_custom_call.1} parent=1 // pred_region
      _
    $region21: #{tpu_custom_call.1} parent=1 // pred_fallthru
      _
    %v22 = vld [vmem:[%s0] sm:$0xf]
    %v23 = vld [vmem:[%s1] sm:$0xf]
    %v24 = vld [vmem:[%s1 + $0x4] sm:$0xf]
    %v25 = vld [vmem:[%s1 + $0x8] sm:$0xf]
    %v26 = vld [vmem:[%s1 + $0xc] sm:$0xf]
    %v27 = vld [vmem:[%s1 + $0x10] sm:$0xf]
    %v28 = vld [vmem:[%s1 + $0x14] sm:$0xf]
    %v29 = vld [vmem:[%s2] sm:$0x1]
    %v31 = vperm.slane %v29, 0
    %v39 = vunpack.c.l.b16 %v23
    %v40 = vunpack.c.l.b16 %v24
    %v41 = vunpack.c.l.b16 %v25
    %v42 = vunpack.c.l.b16 %v26
    %v43 = vunpack.c.l.b16 %v27
    %v44 = vunpack.c.l.b16 %v28
    %v45 = vpack.c.b16 %v40, %v39
    %v46 = vpack.c.b16 %v42, %v41
    %v47 = vpack.c.b16 %v44, %v43
    %vm51 = vcmask 392192
    %v53 = vsel %vm51, %v22, 0
    %55 = vmatpush.bf16.msra.mxu0 0
    %56 = vmatpush.bf16.msra.mxu0 0
    %57 = vmatpush.bf16.msra.mxu0 0
    %58 = vmatpush.bf16.msra.mxu0 0
    %59 = vmatpush.bf16.msra.mxu0 0
    %60 = vmatpush.bf16.msra.mxu0 %v47
    %61 = vmatpush.bf16.msra.mxu0 %v46
    %62 = vmatpush.bf16.msra.mxu0 %v45
    %63 = vmatmul.bf16.gmra.mxu0 %v53
    %v64 = vpop.f32.mrf.mxu0
    %v65 = vadd.f32 %v31, %v64
    %v66 = vpop.f32.mrf.mxu0
    %67 = vdwg.mxu0
    %v68 = vmax.f32 %v65, 0.0
    %v69 = vpack.c.bf16 %v68, %v68
    %v70 = vld [vmem:[%s3] sm:$0xf]
    %v71 = vld [vmem:[%s3 + $0x4] sm:$0xf]
    %v72 = vld [vmem:[%s3 + $0x8] sm:$0xf]
    %v73 = vld [vmem:[%s3 + $0xc] sm:$0xf]
    %v74 = vld [vmem:[%s4] sm:$0x1]
    %v76 = vperm.slane %v74, 0
    %v82 = vunpack.c.l.b16 %v70
    %v83 = vunpack.c.l.b16 %v71
    %v84 = vunpack.c.l.b16 %v72
    %v85 = vunpack.c.l.b16 %v73
    %v86 = vpack.c.b16 %v83, %v82
    %v87 = vpack.c.b16 %v85, %v84
    %vm90 = vcmask 261120
    %v92 = vsel %vm90, %v69, 0
    %94 = vmatpush.bf16.msra.mxu0 0
    %95 = vmatpush.bf16.msra.mxu0 0
    %96 = vmatpush.bf16.msra.mxu0 0
    %97 = vmatpush.bf16.msra.mxu0 0
    %98 = vmatpush.bf16.msra.mxu0 0
    %99 = vmatpush.bf16.msra.mxu0 0
    %100 = vmatpush.bf16.msra.mxu0 %v87
    %101 = vmatpush.bf16.msra.mxu0 %v86
    %102 = vmatmul.bf16.gmra.mxu0 %v92
    %v103 = vpop.f32.mrf.mxu0
    %v104 = vadd.f32 %v76, %v103
    %v105 = vpop.f32.mrf.mxu0
    %106 = vdwg.mxu0
    %107 = vst [vmem:[#allocation2] sm:$0xff] %v104
    // Predicated region
    $region22: #{tpu_custom_call.1} parent=1 // pred_check
      _
    $region23: #{tpu_custom_call.1} parent=1 // pred_check_branch
      %109 = sbr.rel (0) target = $region25
    $region24: #{tpu_custom_call.1} parent=1 // pred_region
      %111 = vsyncadd [#allocation3], 0
      %s113 = sshll.u32 [#allocation2], 4
      %s114 = int_to_ptr.vmem [resolvable:$true] %s113
      %s115 = sshll.u32 %s5, 4
      %s116 = int_to_ptr.hbm [resolvable:$true] %s115
      %118 = dma.vmem_to_hbm [thread:$0]  %s114, 128, %s116, [#allocation3]
    $region25: #{tpu_custom_call.1} parent=1 // pred_fallthru
      _
    // Predicated region
    $region26: #{tpu_custom_call.1} parent=1 // pred_check
      _
    $region27: #{tpu_custom_call.1} parent=1 // pred_check_branch
      %120 = sbr.rel (0) target = $region29
    $region28: #{tpu_custom_call.1} parent=1 // pred_region
      %122 = dma.done [#allocation3], 128
    $region29: #{tpu_custom_call.1} parent=1 // pred_fallthru
      _
    %123 = vsyncpa [#allocation3], 1

</llo_original>
